<compile_context>
chip_gen: v6e
topology: v6e:2x2x1
jax: 0.10.0
libtpu: 0.0.40
codegen_flags: <defaults>
</compile_context>

<pallas_src>
import functools

import jax
import jax.numpy as jnp
from jax import lax
from jax.experimental import pallas as pl
from jax.experimental.pallas import tpu as pltpu


def _kl_block_kernel(q_ref, p_ref, out_ref, *, rows_total, tile_rows, needs_mask):
    """Reduce one (tile_rows, W) block of p*(log p - log q) to a partial sum."""
    p = p_ref[...].astype(jnp.float32)
    q = q_ref[...].astype(jnp.float32)
    # Two EUP logs per element.  log(p/q) would not reduce EUP work (f32 divide
    # also goes through the EUP reciprocal) and log p - log q matches the
    # PyTorch reference expression exactly.
    kl = p * (jnp.log(p) - jnp.log(q))
    if needs_mask:
        # Ragged last row tile: rows >= rows_total must contribute exactly 0.
        i = pl.program_id(0)
        valid = rows_total - i * tile_rows
        row_ids = lax.broadcasted_iota(jnp.int32, kl.shape, 0)
        kl = jnp.where(row_ids < valid, kl, 0.0)
    s = jnp.sum(kl)
    # Lane-dense, (8,128)-aligned store of this block's partial sum.
    out_ref[...] = jnp.full(out_ref.shape, s, dtype=jnp.float32)


@functools.partial(jax.jit, static_argnames=("reduction", "block_elems"))
def kl_loss(q, p, reduction="sum", block_elems=256 * 1024):
    """Pallas implementation of KLLoss.forward(q, p, reduction)."""
    assert q.shape == p.shape, "q and p must have the same shape"
    shape = q.shape
    d = shape[-1]
    rows = 1
    for s in shape[:-1]:
        rows *= s
    n = rows * d

    # ---- Lane-dense slab layout (reshape of contiguous data is free). -------
    lane_w = None
    for w in (1024, 512, 256, 128):
        if n % w == 0:
            lane_w = w
            break
    if lane_w is None:
        lane_w = d  # fallback: natural layout, last dim kept at full extent.
    rows_slab = n // lane_w

    q2 = q.reshape(rows_slab, lane_w)
    p2 = p.reshape(rows_slab, lane_w)

    # ---- Row tile: ~block_elems elements per input block, multiple of 8. ----
    tile_rows = max(8, (block_elems // lane_w) // 8 * 8)
    if tile_rows >= rows_slab:
        tile_rows = rows_slab  # full-extent block: always legal, single step.
    n_blocks = (rows_slab + tile_rows - 1) // tile_rows
    needs_mask = (rows_slab % tile_rows) != 0

    cost = pl.CostEstimate(
        flops=3 * n,                                   # sub + mul + reduce-add
        transcendentals=2 * n,                         # log p, log q
        bytes_accessed=n * jnp.dtype(q.dtype).itemsize
        + n * jnp.dtype(p.dtype).itemsize
        + n_blocks * 8 * 128 * 4,
    )

    kernel = functools.partial(
        _kl_block_kernel,
        rows_total=rows_slab,
        tile_rows=tile_rows,
        needs_mask=needs_mask,
    )

    partials = pl.pallas_call(
        kernel,
        out_shape=jax.ShapeDtypeStruct((n_blocks, 8, 128), jnp.float32),
        grid_spec=pltpu.PrefetchScalarGridSpec(
            num_scalar_prefetch=0,
            grid=(n_blocks,),
            in_specs=[
                pl.BlockSpec((tile_rows, lane_w), lambda i: (i, 0)),
                pl.BlockSpec((tile_rows, lane_w), lambda i: (i, 0)),
            ],
            out_specs=pl.BlockSpec((1, 8, 128), lambda i: (i, 0, 0)),
        ),
        compiler_params=pltpu.CompilerParams(
            # Blocks are fully independent -> megacore-shardable on v7x,
            # harmless on single-TC v5e/v6e.
            dimension_semantics=("parallel",),
            vmem_limit_bytes=32 * 1024 * 1024,
        ),
        cost_estimate=cost,
    )(q2, p2)

    total = jnp.sum(partials[:, 0, 0])
    if reduction == "mean":
        total = total / jnp.float32(rows)
    return total


def _reference(q, p, reduction="sum"):
    kl = jnp.sum(p * (jnp.log(p) - jnp.log(q)), axis=-1)
    return jnp.mean(kl) if reduction == "mean" else jnp.sum(kl)


if __name__ == "__main__":
    key = jax.random.PRNGKey(0)
    kq, kp = jax.random.split(key)

    # Small probability distributions: (batch=2, seq=4, classes=32).
    shape = (2, 4, 32)
    q = jax.nn.softmax(jax.random.normal(kq, shape, dtype=jnp.float32), axis=-1)
    p = jax.nn.softmax(jax.random.normal(kp, shape, dtype=jnp.float32), axis=-1)

    out_sum = jax.block_until_ready(kl_loss(q, p, reduction="sum"))
    out_mean = jax.block_until_ready(kl_loss(q, p, reduction="mean"))
    ref_sum = _reference(q, p, "sum")
    ref_mean = _reference(q, p, "mean")
    assert jnp.allclose(out_sum, ref_sum, rtol=1e-5, atol=1e-5), (out_sum, ref_sum)
    assert jnp.allclose(out_mean, ref_mean, rtol=1e-5, atol=1e-5), (out_mean, ref_mean)

    # Second small case with a deliberately tiny block size to exercise the
    # multi-block + ragged-last-tile masking path.
    shape2 = (40, 256)
    q2 = jax.nn.softmax(jax.random.normal(kq, shape2, dtype=jnp.float32), axis=-1)
    p2 = jax.nn.softmax(jax.random.normal(kp, shape2, dtype=jnp.float32), axis=-1)
    out2 = jax.block_until_ready(kl_loss(q2, p2, reduction="sum", block_elems=8 * 1024))
    ref2 = _reference(q2, p2, "sum")
    assert jnp.allclose(out2, ref2, rtol=1e-5, atol=1e-5), (out2, ref2)

    print("KERNEL_OK")
</pallas_src>

<mosaic_0001>
module attributes {stable_mosaic.version = 11 : i64} {
  func.func @_kl_block_kernel(%arg0: i32, %arg1: memref<1x256xf32, #tpu.memory_space<vmem>>, %arg2: memref<1x256xf32, #tpu.memory_space<vmem>>, %arg3: memref<1x8x128xf32, #tpu.memory_space<vmem>>) attributes {dimension_semantics = [#tpu.dimension_semantics<parallel>], iteration_bounds = array<i64: 1>, scalar_prefetch = 0 : i64, scratch_operands = 0 : i64, tpu.core_type = #tpu.core_type<tc>, window_params = [{transform_indices = @transform_0, window_bounds = array<i64: 1, 256>}, {transform_indices = @transform_1, window_bounds = array<i64: 1, 256>}, {transform_indices = @transform_2, window_bounds = array<i64: 1, 8, 128>}]} {
    %c0 = arith.constant 0 : index
    %c0_0 = arith.constant 0 : index
    %0 = vector.load %arg2[%c0, %c0_0] : memref<1x256xf32, #tpu.memory_space<vmem>>, vector<1x256xf32>
    %c0_1 = arith.constant 0 : index
    %c0_2 = arith.constant 0 : index
    %1 = vector.load %arg1[%c0_1, %c0_2] : memref<1x256xf32, #tpu.memory_space<vmem>>, vector<1x256xf32>
    %2 = math.log %0 : vector<1x256xf32>
    %3 = math.log %1 : vector<1x256xf32>
    %4 = arith.subf %2, %3 : vector<1x256xf32>
    %5 = arith.mulf %0, %4 : vector<1x256xf32>
    %6 = vector.shape_cast %5 : vector<1x256xf32> to vector<1x1x256xf32>
    %cst = arith.constant dense<0.000000e+00> : vector<1xf32>
    %7 = vector.multi_reduction <add>, %6, %cst [1, 2] : vector<1x1x256xf32> to vector<1xf32>
    %8 = vector.shape_cast %7 : vector<1xf32> to vector<1x1x1xf32>
    %9 = vector.extract %8[0, 0, 0] : f32 from vector<1x1x1xf32>
    %10 = vector.broadcast %9 : f32 to vector<1x8x128xf32>
    %c0_3 = arith.constant 0 : index
    %c0_4 = arith.constant 0 : index
    %c0_5 = arith.constant 0 : index
    %11 = vector.load %arg3[%c0_3, %c0_4, %c0_5] : memref<1x8x128xf32, #tpu.memory_space<vmem>>, vector<1x8x128xf32>
    tpu.vector_store %arg3[%c0_3, %c0_4, %c0_5], %10 {strides = array<i32>} : memref<1x8x128xf32, #tpu.memory_space<vmem>>, vector<1x8x128xf32>,
    return
  }
  func.func @transform_0(%arg0: i32) -> (i32, i32) {
    %c0_i32 = arith.constant 0 : i32
    %c0_i32_0 = arith.constant 0 : i32
    return %arg0, %c0_i32 : i32, i32
  }
  func.func @transform_1(%arg0: i32) -> (i32, i32) {
    %c0_i32 = arith.constant 0 : i32
    %c0_i32_0 = arith.constant 0 : i32
    return %arg0, %c0_i32 : i32, i32
  }
  func.func @transform_2(%arg0: i32) -> (i32, i32, i32) {
    %c0_i32 = arith.constant 0 : i32
    %c0_i32_0 = arith.constant 0 : i32
    %c0_i32_1 = arith.constant 0 : i32
    return %arg0, %c0_i32, %c0_i32_0 : i32, i32, i32
  }
}

</mosaic_0001>

<llo_original>
// kernel: kl_loss.1
$region0: #{kl_loss.1}
  #allocation0 [shape = 'u32[]', space=smem, size = 0x4, offset = 0x4, fixed_abs, tag = 'smem constant byte address 0x4 - core index']
  #allocation1 [shape = 'u32[144,128]{1,0:T(1,128)}', space=vmem, size = 0x12000, scoped, tag = 'internal scratch']
  %s0 = inlined_call_operand.vmem [shape: f32[1,256], index: 0, kind: input, shape index: {}]
  %s1 = inlined_call_operand.vmem [shape: f32[1,256], index: 1, kind: input, shape index: {}]
  %s2 = inlined_call_operand.vmem [shape: f32[1,8,128], index: 2, kind: output, shape index: {}]
  %s3 = sld [smem:[#allocation0]]
  $region18: #{kl_loss.1} parent=0
    _
  %s5 = ssub.s32 1, %s3
  %s6 = scalar_select 0, %s5, %s3
  // Predicated region
  $region2: #{kl_loss.1} parent=0 // pred_check
    _
  $region3: #{kl_loss.1} parent=0 // pred_check_branch
    %8 = sbr.rel (0) target = $region5
  $region4: #{kl_loss.1} parent=0 // pred_region
    _
  $region5: #{kl_loss.1} parent=0 // pred_fallthru
    _
  // Predicated region
  $region6: #{kl_loss.1} parent=0 // pred_check
    _
  $region7: #{kl_loss.1} parent=0 // pred_check_branch
    %10 = sbr.rel (0) target = $region9
  $region8: #{kl_loss.1} parent=0 // pred_region
    _
  $region9: #{kl_loss.1} parent=0 // pred_fallthru
    _
  %v11 = vld [vmem:[%s1] sm:$0x3]
  %v12 = vld [vmem:[%s0] sm:$0x3]
  %v13 = vlog2.pop %v11
  %v14 = vmul.f32 %v13, 0.6931472
  %v15 = vlog2.pop %v12
  %v16 = vmul.f32 %v15, 0.6931472
  %v17 = vsub.f32 %v14, %v16
  %v18 = vmul.f32 %v11, %v17
  %v20 = vlaneseq
  %v21 = vshrl.u32 %v20, 7
  %v22 = vsub.s32 0, %v21
  %v23 = vrot.slane %v18, %v22
  %v24 = vlaneseq
  %v25 = vshrl.u32 %v24, 7
  %v26 = vsub.s32 1, %v25
  %v27 = vrot.slane %v18, %v26
  %vm30 = vcmask 1040384
  %v31 = vsel %vm30, %v23, 0.0
  %v32 = vsel %vm30, %v27, 0.0
  %v33 = vadd.f32 %v31, %v32
  %34 = vadd.xlane.f32.xlu0 %v33
  %v35 = vpop.xlane.xlu0 %34
  %v36 = vrot.slane %v35, 4
  %v37 = vadd.f32 %v35, %v36
  %v38 = vrot.slane %v37, 2
  %v39 = vadd.f32 %v37, %v38
  %v40 = vrot.slane %v39, 1
  %v41 = vadd.f32 %v39, %v40
  %s42 = vtos %v41
  %v43 = vstv %s42
  %44 = vst [vmem:[%s2] sm:$0xff] %v43
  // Predicated region
  $region10: #{kl_loss.1} parent=0 // pred_check
    _
  $region11: #{kl_loss.1} parent=0 // pred_check_branch
    %46 = sbr.rel (0) target = $region13
  $region12: #{kl_loss.1} parent=0 // pred_region
    _
  $region13: #{kl_loss.1} parent=0 // pred_fallthru
    _
  // Predicated region
  $region14: #{kl_loss.1} parent=0 // pred_check
    _
  $region15: #{kl_loss.1} parent=0 // pred_check_branch
    %48 = sbr.rel (0) target = $region17
  $region16: #{kl_loss.1} parent=0 // pred_region
    _
  $region17: #{kl_loss.1} parent=0 // pred_fallthru
    _

</llo_original>
